<compile_context>
chip_gen: v5e
topology: v5e:2x2
jax: 0.10.0
libtpu: 0.0.40
codegen_flags: <defaults>
</compile_context>

<pallas_src>
import functools

import numpy as np
import jax
import jax.numpy as jnp
from jax.experimental import pallas as pl
from jax.experimental.pallas import tpu as pltpu


def _cdiv(a, b):
    return -(-a // b)


def _round_up(x, m):
    return _cdiv(x, m) * m


# ---------------------------------------------------------------------------
# Host-side (numpy) construction of the sampling coordinates and the 1-D
# bilinear interpolation matrices -- exactly LogFrequencyScale.get_grid +
# torch grid_sample (bilinear, zeros padding, align_corners=False) math.
# ---------------------------------------------------------------------------
def _grid_coords(h_out, w_out, warp):
    x = np.linspace(-1.0, 1.0, w_out)
    y = np.linspace(-1.0, 1.0, h_out)
    if warp:
        gy = (np.power(21.0, (y + 1.0) / 2.0) - 11.0) / 10.0
    else:
        gy = np.log(y * 10.0 + 11.0) / np.log(21.0) * 2.0 - 1.0
    return gy.astype(np.float32), x.astype(np.float32)


def _bilinear_matrix(coords, in_size):
    """1-D bilinear sampling matrix for normalized coords (align_corners=False,
    padding_mode='zeros'); out-of-range taps contribute nothing (zero rows)."""
    g = np.asarray(coords, np.float32)
    ix = ((g + 1.0) * in_size - 1.0) * 0.5
    ix0 = np.floor(ix)
    w1 = ix - ix0
    w0 = 1.0 - w1
    i0 = ix0.astype(np.int64)
    i1 = i0 + 1
    m = np.zeros((g.shape[0], in_size), np.float32)
    rows = np.arange(g.shape[0])
    v0 = (i0 >= 0) & (i0 < in_size)
    v1 = (i1 >= 0) & (i1 < in_size)
    m[rows[v0], i0[v0]] += w0[v0]
    m[rows[v1], i1[v1]] += w1[v1]
    return m


# ---------------------------------------------------------------------------
# Per-generation VMEM budgeting and tile selection.
# ---------------------------------------------------------------------------
_MAX_TB = 32  # cap on the statically-unrolled per-slab loop


def _vmem_budget():
    """(resident-set budget, vmem_limit_bytes) per TPU generation."""
    cap = None
    try:
        cap = getattr(pltpu.get_tpu_info(), "vmem_capacity_bytes", None)
    except Exception:
        cap = None
    if cap is None:
        cap = 64 << 20                        # unknown -> assume smallest (v7x-class)
    if cap <= (64 << 20):                     # v7x: 64 MiB physical per TensorCore
        return 24 << 20, 32 << 20
    return 48 << 20, 64 << 20                 # v5e / v6e: 128 MiB physical


def _choose_tiles(b, h_in, wc_in, h_out, wcout_pad, in_itemsize, w_itemsize, budget):
    """Pick (tb, th): batch-slab count per grid step and H_out tile, budgeting the
    full resident VMEM set and keeping >=2 (preferably even) parallel grid steps."""
    kx_bytes = 2 * wc_in * wcout_pad * w_itemsize        # worst case: double-buffered

    def resident(tb, th):
        wy_bytes = 2 * th * h_in * w_itemsize
        in_blk = 2 * tb * h_in * wc_in * in_itemsize
        out_blk = 2 * tb * th * wcout_pad * 4
        tmp = 4 * max(th * wc_in, h_in * wcout_pad)      # one live slab intermediate
        return kx_bytes + wy_bytes + in_blk + out_blk + tmp

    th = h_out
    per_tb = 2 * h_in * wc_in * in_itemsize + 2 * th * wcout_pad * 4
    tb = min(b, _MAX_TB, max(0, (budget - resident(0, th)) // per_tb))
    if tb == 0:
        # Even a single full-H_out slab does not fit -> tile H_out (8-sublane mult).
        # TODO(synk): very large W (Kx ~ (W*C)^2 bytes) additionally needs W_out tiling.
        tb = 1
        th = _round_up(max(h_out // 2, 8), 8)
        while th > 8 and resident(1, th) > budget:
            th = _round_up(max(th // 2, 8), 8)

    # Megacore (v7x: 2 TensorCores share the grid): ensure >= 2 grid steps.
    nb = _cdiv(b, tb)
    if nb == 1 and b > 1:
        tb = _cdiv(b, 2)
        nb = _cdiv(b, tb)
    elif nb == 1 and th == h_out and h_out >= 16:
        th = _round_up(_cdiv(h_out, 2), 8)               # B == 1: split H_out instead
    nh = _cdiv(h_out, th)

    # Prefer an even total step count when a slightly smaller slab achieves it.
    if nb > 1 and (nb * nh) % 2 == 1:
        tb2 = _cdiv(b, nb + 1)
        if tb2 >= 1 and (_cdiv(b, tb2) * nh) % 2 == 0:
            tb, nb = tb2, _cdiv(b, tb2)
    return tb, th


# ---------------------------------------------------------------------------
# Pallas kernel: one grid step = (batch slab i) x (H_out tile j).
# ---------------------------------------------------------------------------
def _warp_kernel(wy_ref, kx_ref, x_ref, o_ref, *, wy_first):
    """out[s] = Wy_tile @ x[s] @ Kx for every slab s of the batch block.
    Statically unrolled per-slab loop (== lax.fori_loop(..., unroll=True)):
    no tb-wide Wy broadcast, only one small intermediate live at a time."""
    wy = wy_ref[...]                                     # (th, H_in)
    kx = kx_ref[...]                                     # (W*C, W_out*C padded)
    for s in range(x_ref.shape[0]):
        x_s = x_ref[s]                                   # (H_in, W*C)
        if wy_first:
            t = jnp.dot(wy, x_s, preferred_element_type=jnp.float32)
            o = jnp.dot(t.astype(kx.dtype), kx, preferred_element_type=jnp.float32)
        else:
            t = jnp.dot(x_s, kx, preferred_element_type=jnp.float32)
            o = jnp.dot(wy, t.astype(wy.dtype), preferred_element_type=jnp.float32)
        o_ref[s] = o.astype(o_ref.dtype)


def _warp_pallas(x, wy, kx, *, tb, th, wy_first, out_dtype, vmem_limit, cost):
    b_pad, h_in, wc_in = x.shape
    h_out_pad = wy.shape[0]
    wcout_pad = kx.shape[1]
    nb, nh = b_pad // tb, h_out_pad // th
    kernel = functools.partial(_warp_kernel, wy_first=wy_first)
    out_shape = jax.ShapeDtypeStruct((b_pad, h_out_pad, wcout_pad), out_dtype)

    def call(single_buffer_weights):
        def wspec(shape, imap, invariant):
            if single_buffer_weights and invariant:
                return pl.BlockSpec(shape, imap, pipeline_mode=pl.Buffered(1))
            return pl.BlockSpec(shape, imap)

        in_specs = [
            # Wy tile: grid-invariant only when H_out is not tiled.
            wspec((th, h_in), lambda i, j: (j, 0), invariant=(nh == 1)),
            # Kx = Wx^T (x) I_C, zero-padded to 128 lanes: fully grid-invariant.
            wspec((wc_in, wcout_pad), lambda i, j: (0, 0), invariant=True),
            # Batch slab of the BHWC input with (W, C) fused into the lane axis.
            pl.BlockSpec((tb, h_in, wc_in), lambda i, j: (i, 0, 0)),
        ]
        return pl.pallas_call(
            kernel,
            out_shape=out_shape,
            grid=(nb, nh),
            in_specs=in_specs,
            out_specs=pl.BlockSpec((tb, th, wcout_pad), lambda i, j: (i, j, 0)),
            compiler_params=pltpu.CompilerParams(
                dimension_semantics=("parallel", "parallel"),
                vmem_limit_bytes=vmem_limit),
            cost_estimate=cost,
        )(wy, kx, x)

    # Single-buffer the resident weights when supported (halves their VMEM);
    # perf-only fallback to default double-buffering otherwise.
    try:
        return call(True)
    except Exception:
        return call(False)


# ---------------------------------------------------------------------------
# Module-equivalent wrapper (ordering='BHWC').
# ---------------------------------------------------------------------------
def log_frequency_scale(sp, warp=True, shape=(None, None),
                        compute_dtype=jnp.float32):
    """Pallas equivalent of LogFrequencyScale(warp, 'BHWC', shape).forward.

    sp: (B, H, W, C) -> (B, H_out, W_out, C), same dtype as sp.
    compute_dtype=jnp.bfloat16 is an opt-in MXU speedup on v6e/v7x (f32 accum).
    """
    b, h, w, c = sp.shape
    h_out = h if shape[0] is None else int(shape[0])
    w_out = w if shape[1] is None else int(shape[1])

    gy, gx = _grid_coords(h_out, w_out, warp)
    wy = _bilinear_matrix(gy, h)                                  # (H_out, H_in)
    wx = _bilinear_matrix(gx, w)                                  # (W_out, W_in)

    wc_in = w * c
    wcout = w_out * c
    wcout_pad = _round_up(wcout, 128)          # lane-dense (unmasked) output stores

    # Right factor acting on the fused (W*C) lane axis: Wx^T (x) I_C.
    kx = np.kron(wx.T, np.eye(c, dtype=np.float32))               # (W*C, W_out*C)
    if wcout_pad != wcout:
        kx = np.pad(kx, ((0, 0), (0, wcout_pad - wcout)))

    cdt = np.dtype(compute_dtype)
    budget, vmem_limit = _vmem_budget()
    tb, th = _choose_tiles(b, h, wc_in, h_out, wcout_pad,
                           cdt.itemsize, cdt.itemsize, budget)
    nb, nh = _cdiv(b, tb), _cdiv(h_out, th)
    b_pad, h_out_pad = nb * tb, nh * th
    if h_out_pad != h_out:
        wy = np.pad(wy, ((0, h_out_pad - h_out), (0, 0)))

    # Contraction order: Wy-first when H_out is tiled (avoids recomputing X @ Kx
    # per H-tile) or when it minimizes the C^2-bearing Kronecker FLOPs.
    fl_wy_first = th * h * wc_in + th * wc_in * wcout_pad         # per (slab, H-tile)
    fl_wx_first = h * wc_in * wcout_pad + th * h * wcout_pad
    wy_first = (nh > 1) or (fl_wy_first <= fl_wx_first)

    x = sp.reshape(b, h, wc_in).astype(cdt)       # BHWC kept; W,C fused into lanes
    if b_pad != b:                                # awkward B: pad instead of tb=1
        x = jnp.pad(x, ((0, b_pad - b), (0, 0), (0, 0)))

    flops = 2 * b_pad * nh * (fl_wy_first if wy_first else fl_wx_first)
    bytes_accessed = (b_pad * h * wc_in * cdt.itemsize
                      + b_pad * h_out_pad * wcout_pad * sp.dtype.itemsize
                      + (wy.size + kx.size) * cdt.itemsize)
    cost = pl.CostEstimate(flops=int(flops), transcendentals=0,
                           bytes_accessed=int(bytes_accessed))

    out = _warp_pallas(x, jnp.asarray(wy, cdt), jnp.asarray(kx, cdt),
                       tb=tb, th=th, wy_first=wy_first, out_dtype=sp.dtype,
                       vmem_limit=vmem_limit, cost=cost)
    return out[:b, :h_out, :wcout].reshape(b, h_out, w_out, c)


# ---------------------------------------------------------------------------
# Independent reference: dense bilinear grid_sample, same defaults as torch
# (bilinear, padding_mode='zeros', align_corners=False), evaluated directly
# from the module's sampling grid on the BCHW-permuted tensor.
# ---------------------------------------------------------------------------
def _grid_sample_ref(x_bchw, grid):
    B, C, H, W = x_bchw.shape

    def one(xb, gb):                                     # xb: (C,H,W), gb: (HO,WO,2)
        ix = ((gb[..., 0] + 1.0) * W - 1.0) * 0.5
        iy = ((gb[..., 1] + 1.0) * H - 1.0) * 0.5
        ix0, iy0 = jnp.floor(ix), jnp.floor(iy)
        out = jnp.zeros((C,) + gb.shape[:2], jnp.float32)
        for dy in (0.0, 1.0):
            for dx in (0.0, 1.0):
                iyn, ixn = iy0 + dy, ix0 + dx
                wgt = (1.0 - jnp.abs(iy - iyn)) * (1.0 - jnp.abs(ix - ixn))
                valid = (iyn >= 0) & (iyn < H) & (ixn >= 0) & (ixn < W)
                iyc = jnp.clip(iyn, 0, H - 1).astype(jnp.int32)
                ixc = jnp.clip(ixn, 0, W - 1).astype(jnp.int32)
                vals = xb[:, iyc, ixc]                   # (C, HO, WO)
                out = out + jnp.where(valid, wgt, 0.0)[None] * vals
        return out

    return jax.vmap(one)(x_bchw, grid)


def _torch_like_grid(bs, ho, wo, warp):
    gy, gx = _grid_coords(ho, wo, warp)
    g = np.zeros((bs, ho, wo, 2), np.float32)
    g[..., 0] = gx[None, None, :]
    g[..., 1] = gy[None, :, None]
    return jnp.asarray(g)


def _check(x, warp, shape):
    y = log_frequency_scale(x, warp=warp, shape=shape)
    jax.block_until_ready(y)
    b, h, w, c = x.shape
    ho = h if shape[0] is None else shape[0]
    wo = w if shape[1] is None else shape[1]
    assert y.shape == (b, ho, wo, c), (y.shape, (b, ho, wo, c))
    grid = _torch_like_grid(b, ho, wo, warp)
    ref = _grid_sample_ref(jnp.transpose(x, (0, 3, 1, 2)).astype(jnp.float32), grid)
    ref = jnp.transpose(ref, (0, 2, 3, 1))
    err = float(jnp.max(jnp.abs(y.astype(jnp.float32) - ref)))
    assert err < 2e-4, err
    return y


if __name__ == "__main__":
    key = jax.random.PRNGKey(0)
    k1, k2, k3 = jax.random.split(key, 3)

    # Default module config: warp=True, ordering='BHWC', no resize.
    # B=2, H=16 freq bins, W=16 time frames, C=2 ([real, imag]).
    x1 = jax.random.normal(k1, (2, 16, 16, 2), dtype=jnp.float32)
    y1 = _check(x1, True, (None, None))
    assert y1.shape == x1.shape and y1.dtype == x1.dtype

    # Awkward batch + resize (exercises batch padding, H_out != H, lane padding).
    x2 = jax.random.normal(k2, (3, 16, 12, 2), dtype=jnp.float32)
    _check(x2, True, (24, 20))

    # warp=False (log -> linear) and B=1 (exercises the H_out megacore split).
    x3 = jax.random.normal(k3, (1, 16, 16, 2), dtype=jnp.float32)
    _check(x3, False, (None, None))

    print("KERNEL_OK")
</pallas_src>

<mosaic_0001>
module attributes {stable_mosaic.version = 11 : i64} {
  func.func @_warp_kernel(%arg0: i32, %arg1: i32, %arg2: memref<16x16xf32, #tpu.memory_space<vmem>>, %arg3: memref<32x128xf32, #tpu.memory_space<vmem>>, %arg4: memref<1x16x32xf32, #tpu.memory_space<vmem>>, %arg5: memref<1x16x128xf32, #tpu.memory_space<vmem>>) attributes {dimension_semantics = [#tpu.dimension_semantics<parallel>, #tpu.dimension_semantics<parallel>], iteration_bounds = array<i64: 2, 1>, scalar_prefetch = 0 : i64, scratch_operands = 0 : i64, tpu.core_type = #tpu.core_type<tc>, window_params = [{pipeline_mode = #tpu.pipeline_mode<synchronous>, transform_indices = @transform_0, window_bounds = array<i64: 16, 16>}, {pipeline_mode = #tpu.pipeline_mode<synchronous>, transform_indices = @transform_1, window_bounds = array<i64: 32, 128>}, {transform_indices = @transform_2, window_bounds = array<i64: 1, 16, 32>}, {transform_indices = @transform_3, window_bounds = array<i64: 1, 16, 128>}]} {
    %c0 = arith.constant 0 : index
    %c0_0 = arith.constant 0 : index
    %0 = vector.load %arg2[%c0, %c0_0] : memref<16x16xf32, #tpu.memory_space<vmem>>, vector<16x16xf32>
    %c0_1 = arith.constant 0 : index
    %c0_2 = arith.constant 0 : index
    %1 = vector.load %arg3[%c0_1, %c0_2] : memref<32x128xf32, #tpu.memory_space<vmem>>, vector<32x128xf32>
    %c0_3 = arith.constant 0 : index
    %c0_4 = arith.constant 0 : index
    %c0_5 = arith.constant 0 : index
    %2 = vector.load %arg4[%c0_3, %c0_4, %c0_5] : memref<1x16x32xf32, #tpu.memory_space<vmem>>, vector<1x16x32xf32>
    %3 = vector.shape_cast %2 : vector<1x16x32xf32> to vector<16x32xf32>
    %cst = arith.constant dense<0.000000e+00> : vector<16x32xf32>
    %4 = tpu.matmul %0, %3, %cst {dimension_numbers = #tpu.dot_dimension_numbers<[1], [0], [0], [1], [0, 0, 1, 1], [], []>} : vector<16x16xf32>, vector<16x32xf32>, vector<16x32xf32> -> vector<16x32xf32>
    %cst_6 = arith.constant dense<0.000000e+00> : vector<16x128xf32>
    %5 = tpu.matmul %4, %1, %cst_6 {dimension_numbers = #tpu.dot_dimension_numbers<[1], [0], [0], [1], [0, 0, 1, 1], [], []>} : vector<16x32xf32>, vector<32x128xf32>, vector<16x128xf32> -> vector<16x128xf32>
    %c0_7 = arith.constant 0 : index
    %c0_8 = arith.constant 0 : index
    %c0_9 = arith.constant 0 : index
    %6 = vector.load %arg5[%c0_7, %c0_8, %c0_9] : memref<1x16x128xf32, #tpu.memory_space<vmem>>, vector<1x16x128xf32>
    %7 = vector.shape_cast %6 : vector<1x16x128xf32> to vector<16x128xf32>
    %8 = vector.shape_cast %5 : vector<16x128xf32> to vector<1x16x128xf32>
    tpu.vector_store %arg5[%c0_7, %c0_8, %c0_9], %8 {strides = array<i32>} : memref<1x16x128xf32, #tpu.memory_space<vmem>>, vector<1x16x128xf32>,
    return
  }
  func.func @transform_0(%arg0: i32, %arg1: i32) -> (i32, i32) {
    %c0_i32 = arith.constant 0 : i32
    %c0_i32_0 = arith.constant 0 : i32
    return %arg1, %c0_i32 : i32, i32
  }
  func.func @transform_1(%arg0: i32, %arg1: i32) -> (i32, i32) {
    %c0_i32 = arith.constant 0 : i32
    %c0_i32_0 = arith.constant 0 : i32
    %c0_i32_1 = arith.constant 0 : i32
    return %c0_i32, %c0_i32_0 : i32, i32
  }
  func.func @transform_2(%arg0: i32, %arg1: i32) -> (i32, i32, i32) {
    %c0_i32 = arith.constant 0 : i32
    %c0_i32_0 = arith.constant 0 : i32
    %c0_i32_1 = arith.constant 0 : i32
    return %arg0, %c0_i32, %c0_i32_0 : i32, i32, i32
  }
  func.func @transform_3(%arg0: i32, %arg1: i32) -> (i32, i32, i32) {
    %c0_i32 = arith.constant 0 : i32
    %c0_i32_0 = arith.constant 0 : i32
    return %arg0, %arg1, %c0_i32 : i32, i32, i32
  }
}

module attributes {stable_mosaic.version = 11 : i64} {
  func.func @_warp_kernel(%arg0: i32, %arg1: i32, %arg2: memref<16x16xf32, #tpu.memory_space<vmem>>, %arg3: memref<32x128xf32, #tpu.memory_space<vmem>>, %arg4: memref<1x16x32xf32, #tpu.memory_space<vmem>>, %arg5: memref<1x16x128xf32, #tpu.memory_space<vmem>>) attributes {dimension_semantics = [#tpu.dimension_semantics<parallel>, #tpu.dimension_semantics<parallel>], iteration_bounds = array<i64: 2, 1>, scalar_prefetch = 0 : i64, scratch_operands = 0 : i64, tpu.core_type = #tpu.core_type<tc>, window_params = [{transform_indices = @transform_0, window_bounds = array<i64: 16, 16>}, {pipeline_mode = #tpu.pipeline_mode<synchronous>, transform_indices = @transform_1, window_bounds = array<i64: 32, 128>}, {transform_indices = @transform_2, window_bounds = array<i64: 1, 16, 32>}, {transform_indices = @transform_3, window_bounds = array<i64: 1, 16, 128>}]} {
    %c0 = arith.constant 0 : index
    %c0_0 = arith.constant 0 : index
    %0 = vector.load %arg2[%c0, %c0_0] : memref<16x16xf32, #tpu.memory_space<vmem>>, vector<16x16xf32>
    %c0_1 = arith.constant 0 : index
    %c0_2 = arith.constant 0 : index
    %1 = vector.load %arg3[%c0_1, %c0_2] : memref<32x128xf32, #tpu.memory_space<vmem>>, vector<32x128xf32>
    %c0_3 = arith.constant 0 : index
    %c0_4 = arith.constant 0 : index
    %c0_5 = arith.constant 0 : index
    %2 = vector.load %arg4[%c0_3, %c0_4, %c0_5] : memref<1x16x32xf32, #tpu.memory_space<vmem>>, vector<1x16x32xf32>
    %3 = vector.shape_cast %2 : vector<1x16x32xf32> to vector<16x32xf32>
    %cst = arith.constant dense<0.000000e+00> : vector<16x32xf32>
    %4 = tpu.matmul %0, %3, %cst {dimension_numbers = #tpu.dot_dimension_numbers<[1], [0], [0], [1], [0, 0, 1, 1], [], []>} : vector<16x16xf32>, vector<16x32xf32>, vector<16x32xf32> -> vector<16x32xf32>
    %cst_6 = arith.constant dense<0.000000e+00> : vector<16x128xf32>
    %5 = tpu.matmul %4, %1, %cst_6 {dimension_numbers = #tpu.dot_dimension_numbers<[1], [0], [0], [1], [0, 0, 1, 1], [], []>} : vector<16x32xf32>, vector<32x128xf32>, vector<16x128xf32> -> vector<16x128xf32>
    %c0_7 = arith.constant 0 : index
    %c0_8 = arith.constant 0 : index
    %c0_9 = arith.constant 0 : index
    %6 = vector.load %arg5[%c0_7, %c0_8, %c0_9] : memref<1x16x128xf32, #tpu.memory_space<vmem>>, vector<1x16x128xf32>
    %7 = vector.shape_cast %6 : vector<1x16x128xf32> to vector<16x128xf32>
    %8 = vector.shape_cast %5 : vector<16x128xf32> to vector<1x16x128xf32>
    tpu.vector_store %arg5[%c0_7, %c0_8, %c0_9], %8 {strides = array<i32>} : memref<1x16x128xf32, #tpu.memory_space<vmem>>, vector<1x16x128xf32>,
    return
  }
  func.func @transform_0(%arg0: i32, %arg1: i32) -> (i32, i32) {
    %c0_i32 = arith.constant 0 : i32
    %c0_i32_0 = arith.constant 0 : i32
    return %arg1, %c0_i32 : i32, i32
  }
  func.func @transform_1(%arg0: i32, %arg1: i32) -> (i32, i32) {
    %c0_i32 = arith.constant 0 : i32
    %c0_i32_0 = arith.constant 0 : i32
    %c0_i32_1 = arith.constant 0 : i32
    return %c0_i32, %c0_i32_0 : i32, i32
  }
  func.func @transform_2(%arg0: i32, %arg1: i32) -> (i32, i32, i32) {
    %c0_i32 = arith.constant 0 : i32
    %c0_i32_0 = arith.constant 0 : i32
    %c0_i32_1 = arith.constant 0 : i32
    return %arg0, %c0_i32, %c0_i32_0 : i32, i32, i32
  }
  func.func @transform_3(%arg0: i32, %arg1: i32) -> (i32, i32, i32) {
    %c0_i32 = arith.constant 0 : i32
    %c0_i32_0 = arith.constant 0 : i32
    return %arg0, %arg1, %c0_i32 : i32, i32, i32
  }
}

</mosaic_0001>

<llo_original>
// kernel: tpu_custom_call.1
$region0: #{tpu_custom_call.1}
  #allocation0 [shape = 'u32[]', space=smem, size = 0x4, offset = 0x4, fixed_abs, tag = 'smem constant byte address 0x4 - core index']
  #allocation1 [shape = 'u32[72,128]{1,0:T(1,128)}', space=vmem, size = 0x9000, scoped, tag = 'internal scratch']
  %s0 = inlined_call_operand.hbm [shape: f32[16,16], index: 0, kind: input, shape index: {}]
  %s1 = inlined_call_operand.hbm [shape: f32[32,128], index: 1, kind: input, shape index: {}]
  %s2 = inlined_call_operand.hbm [shape: f32[2,16,32], index: 2, kind: input, shape index: {}]
  %s3 = inlined_call_operand.hbm [shape: f32[2,16,128], index: 3, kind: output, shape index: {}]
  %s4 = sld [smem:[#allocation0]]
  $region57: #{tpu_custom_call.1} parent=0
    _
  %s6 = ssub.s32 1, %s4
  %s7 = scalar_select 0, %s6, %s4
  $region1: #{tpu_custom_call.1} parent=0
    #allocation2 [shape = 'u8[8192]{0}', space=vmem, size = 0x2000, scoped, tag = 'input window, operand 0, single buffered']
    #allocation3 [shape = 's32[2]{0}', space=sflag, size = 0x8, scoped, tag = 'scoped memory for tpu_custom_call.1']
    #allocation4 [shape = 's32[2]{0}', space=sflag, size = 0x8, scoped, tag = 'scoped memory for tpu_custom_call.1']
    #allocation5 [shape = 'u8[16384]{0}', space=vmem, size = 0x4000, scoped, tag = 'input window, operand 1, single buffered']
    #allocation6 [shape = 's32[1]{0}', space=sflag, size = 0x4, scoped, tag = 'scoped memory for tpu_custom_call.1']
    #allocation7 [shape = 'u8[16384]{0}', space=vmem, size = 0x4000, scoped, tag = 'input window, operand 2']
    #allocation8 [shape = 'u8[16384]{0}', space=vmem, size = 0x4000, scoped, tag = 'output window, operand 0']
    %8 = vsyncpa [#allocation3], 0
    %9 = vsyncpa [#allocation6], 0
    %10 = vsyncpa [#allocation4], 0
    %s11 = scalar_lea.sflag [#allocation4], 1
    %12 = vsyncpa %s11, 0
    loop: start=0, step=1, limit=4
    $region2: #{tpu_custom_call.1} parent=1 // loop_pre_header
      _
    $region3: #{tpu_custom_call.1} parent=1 // loop_header
      %s14 = sphi 0, %s18
      %p15 = scmp.ge.s32.totalorder %s14, 4
      %s21 = sphi 0, %s33
      %s22 = sphi 0, %s29
      %s23 = sphi 0, %s21
      %s24 = sphi 0, %s22
      %s25 = sphi 0, %s23
      %s26 = sphi 0, %s24
      %s36 = sphi 0, %s38
      %s39 = sphi 0, %s36
      %s40 = sphi 0, %s39
      %s56 = sphi 0, %s40
      %s60 = sphi 0, %s60
      %s62 = sphi 0, %s60
      %s63 = sphi 0, %s62
      %s77 = sphi 0, %s63
      %s83 = sphi 0, %s85
      %s86 = sphi 0, %s83
      %s87 = sphi 0, %s86
      %s103 = sphi 0, %s87
      %s111 = sphi 0, %s113
      %s114 = sphi 0, %s111
      %s115 = sphi 0, %s114
      %s131 = sphi 0, %s115
    $region4: #{tpu_custom_call.1} parent=1 // loop_header_branch
      %17 = sbr.rel (%p15) target = $region8
    $region5: #{tpu_custom_call.1} parent=1 // loop_body
      %s19 = ssub.s32 %s14, 1
      %s20 = ssub.s32 %s14, 2
      %s27 = sadd.s32 1, %s22
      %p28 = scmp.ge.s32.totalorder %s27, 1
      %s29 = scalar_select %p28, 0, %s27
      %s30 = sadd.s32 1, %s21
      %s31 = scalar_select %p28, %s30, %s21
      %p32 = scmp.ge.s32.totalorder %s31, 2
      %s33 = scalar_select %p32, 0, %s31
      %s34 = ssub.s32 %s22, %s29
      %p35 = scmp.eq.s32.totalorder %s34, 0
      %s37 = sadd.s32 %s36, 1
      %s38 = scalar_select %p35, %s36, %s37
      %p41 = pneg %p35
      %p42 = scmp.eq.s32.totalorder %s14, 1
      %p43 = por %p41, %p42
      %p44 = scmp.ne.s32.totalorder %s36, %s39
      %p45 = scmp.eq.s32.totalorder %s14, 0
      %p46 = por %p44, %p45
      %p47 = scmp.ne.s32.totalorder %s36, %s39
      %p48 = scmp.eq.s32.totalorder %s19, 1
      %p49 = por %p47, %p48
      %p50 = scmp.ne.s32.totalorder %s39, %s40
      %p51 = scmp.eq.s32.totalorder %s19, 0
      %p52 = por %p50, %p51
      %p53 = scmp.ne.s32.totalorder %s39, %s40
      %p54 = scmp.eq.s32.totalorder %s20, 1
      %p55 = por %p53, %p54
      %p57 = scmp.ne.s32.totalorder %s40, %s56
      %p58 = scmp.eq.s32.totalorder %s20, 0
      %p59 = por %p57, %p58
      %s61 = sadd.s32 %s60, 1
      %p64 = scmp.eq.s32.totalorder %s14, 1
      %p65 = scmp.ne.s32.totalorder %s60, %s62
      %p66 = scmp.eq.s32.totalorder %s14, 0
      %p67 = por %p65, %p66
      %p68 = scmp.ne.s32.totalorder %s60, %s62
      %p69 = scmp.eq.s32.totalorder %s19, 1
      %p70 = por %p68, %p69
      %p71 = scmp.ne.s32.totalorder %s62, %s63
      %p72 = scmp.eq.s32.totalorder %s19, 0
      %p73 = por %p71, %p72
      %p74 = scmp.ne.s32.totalorder %s62, %s63
      %p75 = scmp.eq.s32.totalorder %s20, 1
      %p76 = por %p74, %p75
      %p78 = scmp.ne.s32.totalorder %s63, %s77
      %p79 = scmp.eq.s32.totalorder %s20, 0
      %p80 = por %p78, %p79
      %s81 = ssub.s32 %s21, %s33
      %p82 = scmp.eq.s32.totalorder %s81, 0
      %s84 = sadd.s32 %s83, 1
      %s85 = scalar_select %p82, %s83, %s84
      %p88 = pneg %p82
      %p89 = scmp.eq.s32.totalorder %s14, 1
      %p90 = por %p88, %p89
      %p91 = scmp.ne.s32.totalorder %s83, %s86
      %p92 = scmp.eq.s32.totalorder %s14, 0
      %p93 = por %p91, %p92
      %p94 = scmp.ne.s32.totalorder %s83, %s86
      %p95 = scmp.eq.s32.totalorder %s19, 1
      %p96 = por %p94, %p95
      %p97 = scmp.ne.s32.totalorder %s86, %s87
      %p98 = scmp.eq.s32.totalorder %s19, 0
      %p99 = por %p97, %p98
      %p100 = scmp.ne.s32.totalorder %s86, %s87
      %p101 = scmp.eq.s32.totalorder %s20, 1
      %p102 = por %p100, %p101
      %p104 = scmp.ne.s32.totalorder %s87, %s103
      %p105 = scmp.eq.s32.totalorder %s20, 0
      %p106 = por %p104, %p105
      %s107 = ssub.s32 %s21, %s33
      %s108 = ssub.s32 %s22, %s29
      %s109 = sor.u32 %s107, %s108
      %p110 = scmp.eq.s32.totalorder %s109, 0
      %s112 = sadd.s32 %s111, 1
      %s113 = scalar_select %p110, %s111, %s112
      %p116 = pneg %p110
      %p117 = scmp.eq.s32.totalorder %s14, 1
      %p118 = por %p116, %p117
      %p119 = scmp.ne.s32.totalorder %s111, %s114
      %p120 = scmp.eq.s32.totalorder %s14, 0
      %p121 = por %p119, %p120
      %p122 = scmp.ne.s32.totalorder %s111, %s114
      %p123 = scmp.eq.s32.totalorder %s19, 1
      %p124 = por %p122, %p123
      %p125 = scmp.ne.s32.totalorder %s114, %s115
      %p126 = scmp.eq.s32.totalorder %s19, 0
      %p127 = por %p125, %p126
      %p128 = scmp.ne.s32.totalorder %s114, %s115
      %p129 = scmp.eq.s32.totalorder %s20, 1
      %p130 = por %p128, %p129
      %p132 = scmp.ne.s32.totalorder %s115, %s131
      %p133 = scmp.eq.s32.totalorder %s20, 0
      %p134 = por %p132, %p133
      %p135 = scmp.le.s32.totalorder 1, %s14
      %p136 = scmp.lt.s32.totalorder %s14, 3
      %p137 = pnand %p135, %p136
      %p138 = pneg %p137
      // Predicated region
      $region9: #{tpu_custom_call.1} parent=5 // pred_check
        _
      $region10: #{tpu_custom_call.1} parent=5 // pred_check_branch
        %140 = sbr.rel (%p137) target = $region12
      $region11: #{tpu_custom_call.1} parent=5 // pred_region
        %s141 = ssub.s32 %s14, 1
        // Predicated region
        $region13: #{tpu_custom_call.1} parent=11 // pred_check
          %p142 = pneg %p52
        $region14: #{tpu_custom_call.1} parent=11 // pred_check_branch
          %144 = sbr.rel (%p142) target = $region16
        $region15: #{tpu_custom_call.1} parent=11 // pred_region
          %s145 = smul.u32 2, %s24
          %147 = vsyncadd [#allocation3], 0
          %s148 = smul.addr %s145, 8
          %s149 = scalar_lea.hbm %s0, %s148
          %s150 = sshll.u32 %s149, 4
          %s151 = int_to_ptr.hbm [resolvable:$true] %s150
          %s152 = sshll.u32 [#allocation2], 4
          %s153 = int_to_ptr.vmem [resolvable:$true] %s152
          %158 = dma.hbm_to_vmem [thread:$0]  %s151, 256, %s153, [#allocation3], 128, 128, 8
        $region16: #{tpu_custom_call.1} parent=11 // pred_fallthru
          _
        // Predicated region
        $region17: #{tpu_custom_call.1} parent=11 // pred_check
          %p159 = pneg %p73
        $region18: #{tpu_custom_call.1} parent=11 // pred_check_branch
          %161 = sbr.rel (%p159) target = $region20
        $region19: #{tpu_custom_call.1} parent=11 // pred_region
          %163 = vsyncadd [#allocation6], 0
          %s164 = sshll.u32 %s1, 4
          %s165 = int_to_ptr.hbm [resolvable:$true] %s164
          %s166 = sshll.u32 [#allocation5], 4
          %s167 = int_to_ptr.vmem [resolvable:$true] %s166
          %172 = dma.hbm_to_vmem [thread:$0]  %s165, 512, %s167, [#allocation6], 128, 128, 8
        $region20: #{tpu_custom_call.1} parent=11 // pred_fallthru
          _
      $region12: #{tpu_custom_call.1} parent=5 // pred_fallthru
        _
      %p173 = scmp.lt.s32.totalorder %s14, 2
      // Predicated region
      $region21: #{tpu_custom_call.1} parent=5 // pred_check
        %p174 = pneg %p173
      $region22: #{tpu_custom_call.1} parent=5 // pred_check_branch
        %176 = sbr.rel (%p174) target = $region24
      $region23: #{tpu_custom_call.1} parent=5 // pred_region
        // Predicated region
        $region25: #{tpu_custom_call.1} parent=23 // pred_check
          %p177 = pneg %p93
        $region26: #{tpu_custom_call.1} parent=23 // pred_check_branch
          %179 = sbr.rel (%p177) target = $region28
        $region27: #{tpu_custom_call.1} parent=23 // pred_region
          %s180 = sand.u32 %s14, 1
          %s181 = scalar_lea.sflag [#allocation3], %s180
          %s182 = sand.u32 %s83, 1
          %s183 = smul.addr %s182, 16
          %s184 = scalar_lea.vmem [#allocation7], %s183
          %186 = vsyncadd %s181, 0
          %s187 = smul.addr %s21, 2
          %s188 = smul.addr %s187, 8
          %s189 = scalar_lea.hbm %s2, %s188
          %s190 = sshll.u32 %s189, 4
          %s191 = int_to_ptr.hbm [resolvable:$true] %s190
          %s192 = sshll.u32 %s184, 4
          %s193 = int_to_ptr.vmem [resolvable:$true] %s192
          %198 = dma.hbm_to_vmem [thread:$0]  %s191, 256, %s193, %s181, 128, 128, 8
        $region28: #{tpu_custom_call.1} parent=23 // pred_fallthru
          _
      $region24: #{tpu_custom_call.1} parent=5 // pred_fallthru
        _
      %p199 = scmp.le.s32.totalorder 1, %s14
      %p200 = scmp.lt.s32.totalorder %s14, 3
      %p201 = pnand %p199, %p200
      %p202 = pneg %p201
      // Predicated region
      $region29: #{tpu_custom_call.1} parent=5 // pred_check
        _
      $region30: #{tpu_custom_call.1} parent=5 // pred_check_branch
        %204 = sbr.rel (%p201) target = $region32
      $region31: #{tpu_custom_call.1} parent=5 // pred_region
        %s205 = ssub.s32 %s14, 1
        // Predicated region
        $region33: #{tpu_custom_call.1} parent=31 // pred_check
          %p206 = pneg %p52
        $region34: #{tpu_custom_call.1} parent=31 // pred_check_branch
          %208 = sbr.rel (%p206) target = $region36
        $region35: #{tpu_custom_call.1} parent=31 // pred_region
          %210 = dma.done [#allocation3], 256
        $region36: #{tpu_custom_call.1} parent=31 // pred_fallthru
          _
        // Predicated region
        $region37: #{tpu_custom_call.1} parent=31 // pred_check
          %p211 = pneg %p73
        $region38: #{tpu_custom_call.1} parent=31 // pred_check_branch
          %213 = sbr.rel (%p211) target = $region40
        $region39: #{tpu_custom_call.1} parent=31 // pred_region
          %215 = dma.done [#allocation6], 512
        $region40: #{tpu_custom_call.1} parent=31 // pred_fallthru
          _
        %s216 = sand.u32 %s19, 1
        %s217 = scalar_lea.sflag [#allocation3], %s216
        %s218 = sand.u32 %s86, 1
        %s219 = smul.addr %s218, 16
        %s220 = scalar_lea.vmem [#allocation7], %s219
        // Predicated region
        $region41: #{tpu_custom_call.1} parent=31 // pred_check
          %p221 = pneg %p99
        $region42: #{tpu_custom_call.1} parent=31 // pred_check_branch
          %223 = sbr.rel (%p221) target = $region44
        $region43: #{tpu_custom_call.1} parent=31 // pred_region
          %225 = dma.done %s217, 256
        $region44: #{tpu_custom_call.1} parent=31 // pred_fallthru
          _
        %p226 = pneg %p52
        %p227 = pneg %p49
        %p228 = pneg %p73
        %p229 = pneg %p70
        %s230 = sand.u32 %s19, 1
        %s231 = scalar_lea.sflag [#allocation3], %s230
        %s232 = sand.u32 %s86, 1
        %s233 = smul.addr %s232, 16
        %s234 = scalar_lea.vmem [#allocation7], %s233
        %p235 = pneg %p99
        %p236 = pneg %p96
        %p237 = pneg %p127
        %p238 = pneg %p124
        %s239 = sand.u32 %s114, 1
        %s240 = scalar_lea.sflag [#allocation4], %s239
        %s241 = sand.u32 %s114, 1
        %s242 = smul.addr %s241, 16
        %s243 = scalar_lea.vmem [#allocation8], %s242
        %s244 = smul.u32 2, %s24
        %s245 = smul.u32 2, %s24
        %v246 = vld [vmem:[#allocation2] sm:$0xff]
        %v247 = vld [vmem:[#allocation2 + $0x8] sm:$0xff]
        %v248 = vld [vmem:[#allocation5] sm:$0xff]
        %v249 = vld [vmem:[#allocation5 + $0x8] sm:$0xff]
        %v250 = vld [vmem:[#allocation5 + $0x10] sm:$0xff]
        %v251 = vld [vmem:[#allocation5 + $0x18] sm:$0xff]
        %v252 = vld [vmem:[%s220] sm:$0xff]
        %v253 = vld [vmem:[%s220 + $0x8] sm:$0xff]
        %vm254 = vcmask 130048
        %v256 = vsel %vm254, %v246, 0
        %v259 = vsel %vm254, %v247, 0
        %261 = vmatpush.msra.mxu0 0.0
        %262 = vmatpush.msra.mxu0 0.0
        %263 = vmatpush.msra.mxu0 0.0
        %264 = vmatpush.msra.mxu0 0.0
        %265 = vmatpush.msra.mxu0 0.0
        %266 = vmatpush.msra.mxu0 0.0
        %267 = vmatpush.msra.mxu0 0.0
        %268 = vmatpush.msra.mxu0 0.0
        %269 = vmatpush.msra.mxu0 0.0
        %270 = vmatpush.msra.mxu0 0.0
        %271 = vmatpush.msra.mxu0 0.0
        %272 = vmatpush.msra.mxu0 0.0
        %273 = vmatpush.msra.mxu0 0.0
        %274 = vmatpush.msra.mxu0 0.0
        %275 = vmatpush.msra.mxu0 %v253
        %276 = vmatpush.msra.mxu0 %v252
        %277 = vmatmul.f32.gmra.mxu0 %v256
        %v278 = vpop.f32.mrf.mxu0
        %v279 = vadd.f32 0.0, %v278
        %280 = vmatmul.f32.gmra.mxu0 %v259
        %v281 = vpop.f32.mrf.mxu0
        %v282 = vadd.f32 0.0, %v281
        %283 = vdwg.mxu0
        %vm284 = vcmask 261120
        %v286 = vsel %vm284, %v279, 0
        %v289 = vsel %vm284, %v282, 0
        %291 = vmatpush.msra.mxu0 0.0
        %292 = vmatpush.msra.mxu0 0.0
        %293 = vmatpush.msra.mxu0 0.0
        %294 = vmatpush.msra.mxu0 0.0
        %295 = vmatpush.msra.mxu0 0.0
        %296 = vmatpush.msra.mxu0 0.0
        %297 = vmatpush.msra.mxu0 0.0
        %298 = vmatpush.msra.mxu0 0.0
        %299 = vmatpush.msra.mxu0 0.0
        %300 = vmatpush.msra.mxu0 0.0
        %301 = vmatpush.msra.mxu0 0.0
        %302 = vmatpush.msra.mxu0 0.0
        %303 = vmatpush.msra.mxu0 %v251
        %304 = vmatpush.msra.mxu0 %v250
        %305 = vmatpush.msra.mxu0 %v249
        %306 = vmatpush.msra.mxu0 %v248
        %307 = vmatmul.f32.gmra.mxu0 %v286
        %v308 = vpop.f32.mrf.mxu0
        %v309 = vadd.f32 0.0, %v308
        %310 = vmatmul.f32.gmra.mxu0 %v289
        %v311 = vpop.f32.mrf.mxu0
        %v312 = vadd.f32 0.0, %v311
        %313 = vdwg.mxu0
        %314 = vst [vmem:[%s243] sm:$0xff] %v309
        %315 = vst [vmem:[%s243 + $0x8] sm:$0xff] %v312
        %s316 = sand.u32 %s114, 1
        %s317 = scalar_lea.sflag [#allocation4], %s316
        %s318 = sand.u32 %s114, 1
        %s319 = smul.addr %s318, 16
        %s320 = scalar_lea.vmem [#allocation8], %s319
        // Predicated region
        $region45: #{tpu_custom_call.1} parent=31 // pred_check
          %p321 = pneg %p124
        $region46: #{tpu_custom_call.1} parent=31 // pred_check_branch
          %323 = sbr.rel (%p321) target = $region48
        $region47: #{tpu_custom_call.1} parent=31 // pred_region
          %s324 = smul.u32 2, %s24
          %326 = vsyncadd %s317, 0
          %s327 = smul.addr %s23, 2
          %s328 = sadd.s32 %s324, %s327
          %s329 = smul.addr %s328, 8
          %s330 = scalar_lea.hbm %s3, %s329
          %s331 = sshll.u32 %s320, 4
          %s332 = int_to_ptr.vmem [resolvable:$true] %s331
          %s333 = sshll.u32 %s330, 4
          %s334 = int_to_ptr.hbm [resolvable:$true] %s333
          %339 = dma.vmem_to_hbm [thread:$0]  %s332, 256, %s334, %s317, 128, 128, 8
        $region48: #{tpu_custom_call.1} parent=31 // pred_fallthru
          _
      $region32: #{tpu_custom_call.1} parent=5 // pred_fallthru
        _
      %p340 = scmp.le.s32.totalorder 2, %s14
      // Predicated region
      $region49: #{tpu_custom_call.1} parent=5 // pred_check
        %p341 = pneg %p340
      $region50: #{tpu_custom_call.1} parent=5 // pred_check_branch
        %343 = sbr.rel (%p341) target = $region52
      $region51: #{tpu_custom_call.1} parent=5 // pred_region
        %s344 = ssub.s32 %s14, 2
        // Predicated region
        $region53: #{tpu_custom_call.1} parent=51 // pred_check
          %p345 = pneg %p130
        $region54: #{tpu_custom_call.1} parent=51 // pred_check_branch
          %347 = sbr.rel (%p345) target = $region56
        $region55: #{tpu_custom_call.1} parent=51 // pred_region
          %s348 = sand.u32 %s115, 1
          %s349 = scalar_lea.sflag [#allocation4], %s348
          %s350 = sand.u32 %s115, 1
          %s351 = smul.addr %s350, 16
          %s352 = scalar_lea.vmem [#allocation8], %s351
          %354 = dma.done %s349, 256
        $region56: #{tpu_custom_call.1} parent=51 // pred_fallthru
          _
      $region52: #{tpu_custom_call.1} parent=5 // pred_fallthru
        _
    $region6: #{tpu_custom_call.1} parent=1 // loop_footer
      %s18 = sadd.s32 1, %s14
    $region7: #{tpu_custom_call.1} parent=1 // loop_footer_branch
      %13 = sbr.rel target = $region3
    $region8: #{tpu_custom_call.1} parent=1 // loop_exit
      _
    %355 = vsyncpa [#allocation3], 1
    %s356 = scalar_lea.sflag [#allocation3], 1
    %357 = vsyncpa %s356, 1
    %358 = vsyncpa [#allocation6], 1
    %359 = vsyncpa [#allocation4], 1
    %s360 = scalar_lea.sflag [#allocation4], 1
    %361 = vsyncpa %s360, 1

// kernel: tpu_custom_call.1
$region0: #{tpu_custom_call.1}
  #allocation0 [shape = 'u32[]', space=smem, size = 0x4, offset = 0x4, fixed_abs, tag = 'smem constant byte address 0x4 - core index']
  #allocation1 [shape = 'u32[72,128]{1,0:T(1,128)}', space=vmem, size = 0x9000, scoped, tag = 'internal scratch']
  %s0 = inlined_call_operand.hbm [shape: f32[16,16], index: 0, kind: input, shape index: {}]
  %s1 = inlined_call_operand.hbm [shape: f32[32,128], index: 1, kind: input, shape index: {}]
  %s2 = inlined_call_operand.hbm [shape: f32[2,16,32], index: 2, kind: input, shape index: {}]
  %s3 = inlined_call_operand.hbm [shape: f32[2,16,128], index: 3, kind: output, shape index: {}]
  %s4 = sld [smem:[#allocation0]]
  $region57: #{tpu_custom_call.1} parent=0
    _
  %s6 = ssub.s32 1, %s4
  %s7 = scalar_select 0, %s6, %s4
  $region1: #{tpu_custom_call.1} parent=0
    #allocation2 [shape = 'u8[8192]{0}', space=vmem, size = 0x2000, scoped, tag = 'input window, operand 0, single buffered']
    #allocation3 [shape = 's32[2]{0}', space=sflag, size = 0x8, scoped, tag = 'scoped memory for tpu_custom_call.1']
    #allocation4 [shape = 's32[2]{0}', space=sflag, size = 0x8, scoped, tag = 'scoped memory for tpu_custom_call.1']
    #allocation5 [shape = 'u8[16384]{0}', space=vmem, size = 0x4000, scoped, tag = 'input window, operand 1, single buffered']
    #allocation6 [shape = 's32[1]{0}', space=sflag, size = 0x4, scoped, tag = 'scoped memory for tpu_custom_call.1']
    #allocation7 [shape = 'u8[16384]{0}', space=vmem, size = 0x4000, scoped, tag = 'input window, operand 2']
    #allocation8 [shape = 'u8[16384]{0}', space=vmem, size = 0x4000, scoped, tag = 'output window, operand 0']
    %8 = vsyncpa [#allocation3], 0
    %9 = vsyncpa [#allocation6], 0
    %10 = vsyncpa [#allocation4], 0
    %s11 = scalar_lea.sflag [#allocation4], 1
    %12 = vsyncpa %s11, 0
    loop: start=0, step=1, limit=4
    $region2: #{tpu_custom_call.1} parent=1 // loop_pre_header
      _
    $region3: #{tpu_custom_call.1} parent=1 // loop_header
      %s14 = sphi 0, %s18
      %p15 = scmp.ge.s32.totalorder %s14, 4
      %s21 = sphi 0, %s33
      %s22 = sphi 0, %s29
      %s23 = sphi 0, %s21
      %s24 = sphi 0, %s22
      %s25 = sphi 0, %s23
      %s26 = sphi 0, %s24
      %s36 = sphi 0, %s38
      %s39 = sphi 0, %s36
      %s40 = sphi 0, %s39
      %s56 = sphi 0, %s40
      %s60 = sphi 0, %s60
      %s62 = sphi 0, %s60
      %s63 = sphi 0, %s62
      %s77 = sphi 0, %s63
      %s83 = sphi 0, %s85
      %s86 = sphi 0, %s83
      %s87 = sphi 0, %s86
      %s103 = sphi 0, %s87
      %s111 = sphi 0, %s113
      %s114 = sphi 0, %s111
      %s115 = sphi 0, %s114
      %s131 = sphi 0, %s115
    $region4: #{tpu_custom_call.1} parent=1 // loop_header_branch
      %17 = sbr.rel (%p15) target = $region8
    $region5: #{tpu_custom_call.1} parent=1 // loop_body
      %s19 = ssub.s32 %s14, 1
      %s20 = ssub.s32 %s14, 2
      %s27 = sadd.s32 1, %s22
      %p28 = scmp.ge.s32.totalorder %s27, 1
      %s29 = scalar_select %p28, 0, %s27
      %s30 = sadd.s32 1, %s21
      %s31 = scalar_select %p28, %s30, %s21
      %p32 = scmp.ge.s32.totalorder %s31, 2
      %s33 = scalar_select %p32, 0, %s31
      %s34 = ssub.s32 %s22, %s29
      %p35 = scmp.eq.s32.totalorder %s34, 0
      %s37 = sadd.s32 %s36, 1
      %s38 = scalar_select %p35, %s36, %s37
      %p41 = pneg %p35
      %p42 = scmp.eq.s32.totalorder %s14, 1
      %p43 = por %p41, %p42
      %p44 = scmp.ne.s32.totalorder %s36, %s39
      %p45 = scmp.eq.s32.totalorder %s14, 0
      %p46 = por %p44, %p45
      %p47 = scmp.ne.s32.totalorder %s36, %s39
      %p48 = scmp.eq.s32.totalorder %s19, 1
      %p49 = por %p47, %p48
      %p50 = scmp.ne.s32.totalorder %s39, %s40
      %p51 = scmp.eq.s32.totalorder %s19, 0
      %p52 = por %p50, %p51
      %p53 = scmp.ne.s32.totalorder %s39, %s40
      %p54 = scmp.eq.s32.totalorder %s20, 1
      %p55 = por %p53, %p54
      %p57 = scmp.ne.s32.totalorder %s40, %s56
      %p58 = scmp.eq.s32.totalorder %s20, 0
      %p59 = por %p57, %p58
      %s61 = sadd.s32 %s60, 1
      %p64 = scmp.eq.s32.totalorder %s14, 1
      %p65 = scmp.ne.s32.totalorder %s60, %s62
      %p66 = scmp.eq.s32.totalorder %s14, 0
      %p67 = por %p65, %p66
      %p68 = scmp.ne.s32.totalorder %s60, %s62
      %p69 = scmp.eq.s32.totalorder %s19, 1
      %p70 = por %p68, %p69
      %p71 = scmp.ne.s32.totalorder %s62, %s63
      %p72 = scmp.eq.s32.totalorder %s19, 0
      %p73 = por %p71, %p72
      %p74 = scmp.ne.s32.totalorder %s62, %s63
      %p75 = scmp.eq.s32.totalorder %s20, 1
      %p76 = por %p74, %p75
      %p78 = scmp.ne.s32.totalorder %s63, %s77
      %p79 = scmp.eq.s32.totalorder %s20, 0
      %p80 = por %p78, %p79
      %s81 = ssub.s32 %s21, %s33
      %p82 = scmp.eq.s32.totalorder %s81, 0
      %s84 = sadd.s32 %s83, 1
      %s85 = scalar_select %p82, %s83, %s84
      %p88 = pneg %p82
      %p89 = scmp.eq.s32.totalorder %s14, 1
      %p90 = por %p88, %p89
      %p91 = scmp.ne.s32.totalorder %s83, %s86
      %p92 = scmp.eq.s32.totalorder %s14, 0
      %p93 = por %p91, %p92
      %p94 = scmp.ne.s32.totalorder %s83, %s86
      %p95 = scmp.eq.s32.totalorder %s19, 1
      %p96 = por %p94, %p95
      %p97 = scmp.ne.s32.totalorder %s86, %s87
      %p98 = scmp.eq.s32.totalorder %s19, 0
      %p99 = por %p97, %p98
      %p100 = scmp.ne.s32.totalorder %s86, %s87
      %p101 = scmp.eq.s32.totalorder %s20, 1
      %p102 = por %p100, %p101
      %p104 = scmp.ne.s32.totalorder %s87, %s103
      %p105 = scmp.eq.s32.totalorder %s20, 0
      %p106 = por %p104, %p105
      %s107 = ssub.s32 %s21, %s33
      %s108 = ssub.s32 %s22, %s29
      %s109 = sor.u32 %s107, %s108
      %p110 = scmp.eq.s32.totalorder %s109, 0
      %s112 = sadd.s32 %s111, 1
      %s113 = scalar_select %p110, %s111, %s112
      %p116 = pneg %p110
      %p117 = scmp.eq.s32.totalorder %s14, 1
      %p118 = por %p116, %p117
      %p119 = scmp.ne.s32.totalorder %s111, %s114
      %p120 = scmp.eq.s32.totalorder %s14, 0
      %p121 = por %p119, %p120
      %p122 = scmp.ne.s32.totalorder %s111, %s114
      %p123 = scmp.eq.s32.totalorder %s19, 1
      %p124 = por %p122, %p123
      %p125 = scmp.ne.s32.totalorder %s114, %s115
      %p126 = scmp.eq.s32.totalorder %s19, 0
      %p127 = por %p125, %p126
      %p128 = scmp.ne.s32.totalorder %s114, %s115
      %p129 = scmp.eq.s32.totalorder %s20, 1
      %p130 = por %p128, %p129
      %p132 = scmp.ne.s32.totalorder %s115, %s131
      %p133 = scmp.eq.s32.totalorder %s20, 0
      %p134 = por %p132, %p133
      %p135 = scmp.le.s32.totalorder 1, %s14
      %p136 = scmp.lt.s32.totalorder %s14, 3
      %p137 = pnand %p135, %p136
      %p138 = pneg %p137
      // Predicated region
      $region9: #{tpu_custom_call.1} parent=5 // pred_check
        _
      $region10: #{tpu_custom_call.1} parent=5 // pred_check_branch
        %140 = sbr.rel (%p137) target = $region12
      $region11: #{tpu_custom_call.1} parent=5 // pred_region
        %s141 = ssub.s32 %s14, 1
        // Predicated region
        $region13: #{tpu_custom_call.1} parent=11 // pred_check
          %p142 = pneg %p52
        $region14: #{tpu_custom_call.1} parent=11 // pred_check_branch
          %144 = sbr.rel (%p142) target = $region16
        $region15: #{tpu_custom_call.1} parent=11 // pred_region
          %s145 = smul.u32 2, %s24
          %147 = vsyncadd [#allocation3], 0
          %s148 = smul.addr %s145, 8
          %s149 = scalar_lea.hbm %s0, %s148
          %s150 = sshll.u32 %s149, 4
          %s151 = int_to_ptr.hbm [resolvable:$true] %s150
          %s152 = sshll.u32 [#allocation2], 4
          %s153 = int_to_ptr.vmem [resolvable:$true] %s152
          %158 = dma.hbm_to_vmem [thread:$0]  %s151, 256, %s153, [#allocation3], 128, 128, 8
        $region16: #{tpu_custom_call.1} parent=11 // pred_fallthru
          _
        // Predicated region
        $region17: #{tpu_custom_call.1} parent=11 // pred_check
          %p159 = pneg %p73
        $region18: #{tpu_custom_call.1} parent=11 // pred_check_branch
          %161 = sbr.rel (%p159) target = $region20
        $region19: #{tpu_custom_call.1} parent=11 // pred_region
          %163 = vsyncadd [#allocation6], 0
          %s164 = sshll.u32 %s1, 4
          %s165 = int_to_ptr.hbm [resolvable:$true] %s164
          %s166 = sshll.u32 [#allocation5], 4
          %s167 = int_to_ptr.vmem [resolvable:$true] %s166
          %172 = dma.hbm_to_vmem [thread:$0]  %s165, 512, %s167, [#allocation6], 128, 128, 8
        $region20: #{tpu_custom_call.1} parent=11 // pred_fallthru
          _
      $region12: #{tpu_custom_call.1} parent=5 // pred_fallthru
        _
      %p173 = scmp.lt.s32.totalorder %s14, 2
      // Predicated region
      $region21: #{tpu_custom_call.1} parent=5 // pred_check
        %p174 = pneg %p173
      $region22: #{tpu_custom_call.1} parent=5 // pred_check_branch
        %176 = sbr.rel (%p174) target = $region24
      $region23: #{tpu_custom_call.1} parent=5 // pred_region
        // Predicated region
        $region25: #{tpu_custom_call.1} parent=23 // pred_check
          %p177 = pneg %p93
        $region26: #{tpu_custom_call.1} parent=23 // pred_check_branch
          %179 = sbr.rel (%p177) target = $region28
        $region27: #{tpu_custom_call.1} parent=23 // pred_region
          %s180 = sand.u32 %s14, 1
          %s181 = scalar_lea.sflag [#allocation3], %s180
          %s182 = sand.u32 %s83, 1
          %s183 = smul.addr %s182, 16
          %s184 = scalar_lea.vmem [#allocation7], %s183
          %186 = vsyncadd %s181, 0
          %s187 = smul.addr %s21, 2
          %s188 = smul.addr %s187, 8
          %s189 = scalar_lea.hbm %s2, %s188
          %s190 = sshll.u32 %s189, 4
          %s191 = int_to_ptr.hbm [resolvable:$true] %s190
          %s192 = sshll.u32 %s184, 4
          %s193 = int_to_ptr.vmem [resolvable:$true] %s192
          %198 = dma.hbm_to_vmem [thread:$0]  %s191, 256, %s193, %s181, 128, 128, 8
        $region28: #{tpu_custom_call.1} parent=23 // pred_fallthru
          _
      $region24: #{tpu_custom_call.1} parent=5 // pred_fallthru
        _
      %p199 = scmp.le.s32.totalorder 1, %s14
      %p200 = scmp.lt.s32.totalorder %s14, 3
      %p201 = pnand %p199, %p200
      %p202 = pneg %p201
      // Predicated region
      $region29: #{tpu_custom_call.1} parent=5 // pred_check
        _
      $region30: #{tpu_custom_call.1} parent=5 // pred_check_branch
        %204 = sbr.rel (%p201) target = $region32
      $region31: #{tpu_custom_call.1} parent=5 // pred_region
        %s205 = ssub.s32 %s14, 1
        // Predicated region
        $region33: #{tpu_custom_call.1} parent=31 // pred_check
          %p206 = pneg %p52
        $region34: #{tpu_custom_call.1} parent=31 // pred_check_branch
          %208 = sbr.rel (%p206) target = $region36
        $region35: #{tpu_custom_call.1} parent=31 // pred_region
          %210 = dma.done [#allocation3], 256
        $region36: #{tpu_custom_call.1} parent=31 // pred_fallthru
          _
        // Predicated region
        $region37: #{tpu_custom_call.1} parent=31 // pred_check
          %p211 = pneg %p73
        $region38: #{tpu_custom_call.1} parent=31 // pred_check_branch
          %213 = sbr.rel (%p211) target = $region40
        $region39: #{tpu_custom_call.1} parent=31 // pred_region
          %215 = dma.done [#allocation6], 512
        $region40: #{tpu_custom_call.1} parent=31 // pred_fallthru
          _
        %s216 = sand.u32 %s19, 1
        %s217 = scalar_lea.sflag [#allocation3], %s216
        %s218 = sand.u32 %s86, 1
        %s219 = smul.addr %s218, 16
        %s220 = scalar_lea.vmem [#allocation7], %s219
        // Predicated region
        $region41: #{tpu_custom_call.1} parent=31 // pred_check
          %p221 = pneg %p99
        $region42: #{tpu_custom_call.1} parent=31 // pred_check_branch
          %223 = sbr.rel (%p221) target = $region44
        $region43: #{tpu_custom_call.1} parent=31 // pred_region
          %225 = dma.done %s217, 256
        $region44: #{tpu_custom_call.1} parent=31 // pred_fallthru
          _
        %p226 = pneg %p52
        %p227 = pneg %p49
        %p228 = pneg %p73
        %p229 = pneg %p70
        %s230 = sand.u32 %s19, 1
        %s231 = scalar_lea.sflag [#allocation3], %s230
        %s232 = sand.u32 %s86, 1
        %s233 = smul.addr %s232, 16
        %s234 = scalar_lea.vmem [#allocation7], %s233
        %p235 = pneg %p99
        %p236 = pneg %p96
        %p237 = pneg %p127
        %p238 = pneg %p124
        %s239 = sand.u32 %s114, 1
        %s240 = scalar_lea.sflag [#allocation4], %s239
        %s241 = sand.u32 %s114, 1
        %s242 = smul.addr %s241, 16
        %s243 = scalar_lea.vmem [#allocation8], %s242
        %s244 = smul.u32 2, %s24
        %s245 = smul.u32 2, %s24
        %v246 = vld [vmem:[#allocation2] sm:$0xff]
        %v247 = vld [vmem:[#allocation2 + $0x8] sm:$0xff]
        %v248 = vld [vmem:[#allocation5] sm:$0xff]
        %v249 = vld [vmem:[#allocation5 + $0x8] sm:$0xff]
        %v250 = vld [vmem:[#allocation5 + $0x10] sm:$0xff]
        %v251 = vld [vmem:[#allocation5 + $0x18] sm:$0xff]
        %v252 = vld [vmem:[%s220] sm:$0xff]
        %v253 = vld [vmem:[%s220 + $0x8] sm:$0xff]
        %vm254 = vcmask 130048
        %v256 = vsel %vm254, %v246, 0
        %v259 = vsel %vm254, %v247, 0
        %261 = vmatpush.msra.mxu0 0.0
        %262 = vmatpush.msra.mxu0 0.0
        %263 = vmatpush.msra.mxu0 0.0
        %264 = vmatpush.msra.mxu0 0.0
        %265 = vmatpush.msra.mxu0 0.0
        %266 = vmatpush.msra.mxu0 0.0
        %267 = vmatpush.msra.mxu0 0.0
        %268 = vmatpush.msra.mxu0 0.0
        %269 = vmatpush.msra.mxu0 0.0
        %270 = vmatpush.msra.mxu0 0.0
        %271 = vmatpush.msra.mxu0 0.0
        %272 = vmatpush.msra.mxu0 0.0
        %273 = vmatpush.msra.mxu0 0.0
        %274 = vmatpush.msra.mxu0 0.0
        %275 = vmatpush.msra.mxu0 %v253
        %276 = vmatpush.msra.mxu0 %v252
        %277 = vmatmul.f32.gmra.mxu0 %v256
        %v278 = vpop.f32.mrf.mxu0
        %v279 = vadd.f32 0.0, %v278
        %280 = vmatmul.f32.gmra.mxu0 %v259
        %v281 = vpop.f32.mrf.mxu0
        %v282 = vadd.f32 0.0, %v281
        %283 = vdwg.mxu0
        %vm284 = vcmask 261120
        %v286 = vsel %vm284, %v279, 0
        %v289 = vsel %vm284, %v282, 0
        %291 = vmatpush.msra.mxu0 0.0
        %292 = vmatpush.msra.mxu0 0.0
        %293 = vmatpush.msra.mxu0 0.0
        %294 = vmatpush.msra.mxu0 0.0
        %295 = vmatpush.msra.mxu0 0.0
        %296 = vmatpush.msra.mxu0 0.0
        %297 = vmatpush.msra.mxu0 0.0
        %298 = vmatpush.msra.mxu0 0.0
        %299 = vmatpush.msra.mxu0 0.0
        %300 = vmatpush.msra.mxu0 0.0
        %301 = vmatpush.msra.mxu0 0.0
        %302 = vmatpush.msra.mxu0 0.0
        %303 = vmatpush.msra.mxu0 %v251
        %304 = vmatpush.msra.mxu0 %v250
        %305 = vmatpush.msra.mxu0 %v249
        %306 = vmatpush.msra.mxu0 %v248
        %307 = vmatmul.f32.gmra.mxu0 %v286
        %v308 = vpop.f32.mrf.mxu0
        %v309 = vadd.f32 0.0, %v308
        %310 = vmatmul.f32.gmra.mxu0 %v289
        %v311 = vpop.f32.mrf.mxu0
        %v312 = vadd.f32 0.0, %v311
        %313 = vdwg.mxu0
        %314 = vst [vmem:[%s243] sm:$0xff] %v309
        %315 = vst [vmem:[%s243 + $0x8] sm:$0xff] %v312
        %s316 = sand.u32 %s114, 1
        %s317 = scalar_lea.sflag [#allocation4], %s316
        %s318 = sand.u32 %s114, 1
        %s319 = smul.addr %s318, 16
        %s320 = scalar_lea.vmem [#allocation8], %s319
        // Predicated region
        $region45: #{tpu_custom_call.1} parent=31 // pred_check
          %p321 = pneg %p124
        $region46: #{tpu_custom_call.1} parent=31 // pred_check_branch
          %323 = sbr.rel (%p321) target = $region48
        $region47: #{tpu_custom_call.1} parent=31 // pred_region
          %s324 = smul.u32 2, %s24
          %326 = vsyncadd %s317, 0
          %s327 = smul.addr %s23, 2
          %s328 = sadd.s32 %s324, %s327
          %s329 = smul.addr %s328, 8
          %s330 = scalar_lea.hbm %s3, %s329
          %s331 = sshll.u32 %s320, 4
          %s332 = int_to_ptr.vmem [resolvable:$true] %s331
          %s333 = sshll.u32 %s330, 4
          %s334 = int_to_ptr.hbm [resolvable:$true] %s333
          %339 = dma.vmem_to_hbm [thread:$0]  %s332, 256, %s334, %s317, 128, 128, 8
        $region48: #{tpu_custom_call.1} parent=31 // pred_fallthru
          _
      $region32: #{tpu_custom_call.1} parent=5 // pred_fallthru
        _
      %p340 = scmp.le.s32.totalorder 2, %s14
      // Predicated region
      $region49: #{tpu_custom_call.1} parent=5 // pred_check
        %p341 = pneg %p340
      $region50: #{tpu_custom_call.1} parent=5 // pred_check_branch
        %343 = sbr.rel (%p341) target = $region52
      $region51: #{tpu_custom_call.1} parent=5 // pred_region
        %s344 = ssub.s32 %s14, 2
        // Predicated region
        $region53: #{tpu_custom_call.1} parent=51 // pred_check
          %p345 = pneg %p130
        $region54: #{tpu_custom_call.1} parent=51 // pred_check_branch
          %347 = sbr.rel (%p345) target = $region56
        $region55: #{tpu_custom_call.1} parent=51 // pred_region
          %s348 = sand.u32 %s115, 1
          %s349 = scalar_lea.sflag [#allocation4], %s348
          %s350 = sand.u32 %s115, 1
          %s351 = smul.addr %s350, 16
          %s352 = scalar_lea.vmem [#allocation8], %s351
          %354 = dma.done %s349, 256
        $region56: #{tpu_custom_call.1} parent=51 // pred_fallthru
          _
      $region52: #{tpu_custom_call.1} parent=5 // pred_fallthru
        _
    $region6: #{tpu_custom_call.1} parent=1 // loop_footer
      %s18 = sadd.s32 1, %s14
    $region7: #{tpu_custom_call.1} parent=1 // loop_footer_branch
      %13 = sbr.rel target = $region3
    $region8: #{tpu_custom_call.1} parent=1 // loop_exit
      _
    %355 = vsyncpa [#allocation3], 1
    %s356 = scalar_lea.sflag [#allocation3], 1
    %357 = vsyncpa %s356, 1
    %358 = vsyncpa [#allocation6], 1
    %359 = vsyncpa [#allocation4], 1
    %s360 = scalar_lea.sflag [#allocation4], 1
    %361 = vsyncpa %s360, 1

</llo_original>
